<compile_context>
chip_gen: v7x
topology: tpu7x:2x2x1
jax: 0.10.0
libtpu: 0.0.40
codegen_flags: <defaults>
</compile_context>

<pallas_src>
import jax
import jax.numpy as jnp
import numpy as np
from jax.experimental import pallas as pl
from jax.experimental.pallas import tpu as pltpu

LANE = 128            # TPU lane width -- output padded to a multiple of this
SUBLANE = 8
MAX_TILE_B = 1024     # largest batch tile per grid step


def _round_up(x: int, m: int) -> int:
    return ((x + m - 1) // m) * m


def _choose_batch_tile(B: int) -> tuple[int, int]:
    """Return (B_pad, tile_b).

    - B <= 128: one grid step (rows padded to a sublane multiple).
    - B  > 128: keep >= 2 grid steps (v7x megacore sharding) and use the
      fattest tile possible (a multiple of 256 once B >= 512 for the 2x256^2
      MXU on v6e/v7x) to amortize per-grid-step overhead.
    """
    if B <= 128:
        B_pad = _round_up(max(B, SUBLANE), SUBLANE)
        return B_pad, B_pad
    if B >= 2 * MAX_TILE_B:
        tile = MAX_TILE_B
    elif B >= 1024:
        tile = 512
    elif B >= 512:
        tile = 256
    else:
        tile = 128
    return _round_up(B, tile), tile


def make_actor_kernel(max_action: float):
    def actor_kernel(x_ref, w1_ref, b1_ref, w2_ref, b2_ref, w3_ref, b3_ref, o_ref):
        w_dtype = w1_ref.dtype   # bf16 (default) or f32; accumulation is always f32

        # fc1 + ReLU  (MXU matmul, f32 accumulate; bias/ReLU on the VPU in f32)
        h1 = jnp.dot(x_ref[...].astype(w_dtype), w1_ref[...],
                     preferred_element_type=jnp.float32)
        h1 = jnp.maximum(h1 + b1_ref[...], 0.0)

        # fc2 + ReLU
        h2 = jnp.dot(h1.astype(w_dtype), w2_ref[...],
                     preferred_element_type=jnp.float32)
        h2 = jnp.maximum(h2 + b2_ref[...], 0.0)

        # fc3 + tanh (EUP), scaled by max_action; lane-dense padded output tile
        h3 = jnp.dot(h2.astype(w_dtype), w3_ref[...],
                     preferred_element_type=jnp.float32)
        o_ref[...] = (max_action * jnp.tanh(h3 + b3_ref[...])).astype(o_ref.dtype)

    return actor_kernel


def actor_forward(x, params, max_action: float):
    """x: (B, state_dim) float32. params: dict from init_params (w3/b3 lane-padded)."""
    B, state_dim = x.shape
    hidden = params["w1"].shape[1]
    out_pad = params["w3"].shape[1]          # lane-padded output width (>= 128)
    action_dim = int(params["action_dim"])
    w_dtype = params["w1"].dtype
    out_dtype = jnp.bfloat16 if w_dtype == jnp.bfloat16 else jnp.float32

    B_pad, tile_b = _choose_batch_tile(B)
    if B_pad != B:
        x = jnp.pad(x, ((0, B_pad - B), (0, 0)))

    const = lambda i: (0, 0)  # weights/biases: same block every step -> VMEM-resident

    nbytes = lambda a: int(a.size) * a.dtype.itemsize
    bytes_accessed = (B_pad * state_dim * 4
                      + sum(nbytes(params[k]) for k in ("w1", "b1", "w2", "b2", "w3", "b3"))
                      + B_pad * out_pad * jnp.dtype(out_dtype).itemsize)
    cost = pl.CostEstimate(
        flops=2 * B_pad * (state_dim * hidden + hidden * hidden + hidden * out_pad),
        transcendentals=B_pad * out_pad,     # tanh
        bytes_accessed=int(bytes_accessed),
    )

    out = pl.pallas_call(
        make_actor_kernel(float(max_action)),
        out_shape=jax.ShapeDtypeStruct((B_pad, out_pad), out_dtype),
        grid=(B_pad // tile_b,),
        in_specs=[
            pl.BlockSpec((tile_b, state_dim), lambda i: (i, 0)),   # x tile
            pl.BlockSpec((state_dim, hidden), const),              # w1
            pl.BlockSpec((1, hidden), const),                      # b1 (f32)
            pl.BlockSpec((hidden, hidden), const),                 # w2
            pl.BlockSpec((1, hidden), const),                      # b2 (f32)
            pl.BlockSpec((hidden, out_pad), const),                # w3 (lane-padded)
            pl.BlockSpec((1, out_pad), const),                     # b3 (lane-padded, f32)
        ],
        out_specs=pl.BlockSpec((tile_b, out_pad), lambda i: (i, 0)),
        compiler_params=pltpu.CompilerParams(
            dimension_semantics=("parallel",),       # megacore on v7x, no-op elsewhere
            vmem_limit_bytes=32 * 1024 * 1024,       # explicit for v5e (16 MiB default)
        ),
        cost_estimate=cost,
    )(x, params["w1"], params["b1"], params["w2"], params["b2"],
      params["w3"], params["b3"])

    return out[:B, :action_dim].astype(jnp.float32)


def init_params(key, state_dim, hidden, action_dim, weight_dtype=jnp.bfloat16):
    """nn.Linear-style init (uniform +/- 1/sqrt(fan_in)); w3/b3 zero-padded to LANE cols.

    Weights stored in `weight_dtype` (bf16 by default for the MXU fast path);
    biases stay f32 because the bias/ReLU/tanh epilogue runs in f32.
    """
    ks = jax.random.split(key, 6)

    def lin(kw, kb, fan_in, fan_out):
        bound = 1.0 / float(np.sqrt(fan_in))
        w = jax.random.uniform(kw, (fan_in, fan_out), jnp.float32, -bound, bound)
        b = jax.random.uniform(kb, (1, fan_out), jnp.float32, -bound, bound)
        return w, b

    w1, b1 = lin(ks[0], ks[1], state_dim, hidden)
    w2, b2 = lin(ks[2], ks[3], hidden, hidden)
    w3, b3 = lin(ks[4], ks[5], hidden, action_dim)

    out_pad = max(LANE, _round_up(action_dim, LANE))
    w3p = jnp.zeros((hidden, out_pad), jnp.float32).at[:, :action_dim].set(w3)
    b3p = jnp.zeros((1, out_pad), jnp.float32).at[:, :action_dim].set(b3)

    return dict(
        w1=w1.astype(weight_dtype), b1=b1,
        w2=w2.astype(weight_dtype), b2=b2,
        w3=w3p.astype(weight_dtype), b3=b3p,
        action_dim=action_dim,
    )


def actor_ref(x, p, max_action):
    """Pure-JAX f32 reference (weights upcast to f32)."""
    w1 = p["w1"].astype(jnp.float32)
    w2 = p["w2"].astype(jnp.float32)
    w3 = p["w3"].astype(jnp.float32)
    h1 = jnp.maximum(x @ w1 + p["b1"], 0.0)
    h2 = jnp.maximum(h1 @ w2 + p["b2"], 0.0)
    out = max_action * jnp.tanh(h2 @ w3 + p["b3"])
    return out[:, : int(p["action_dim"])]


if __name__ == "__main__":
    key = jax.random.PRNGKey(0)
    k_x, k_p = jax.random.split(key)

    state_dim, hidden, action_dim = 16, 256, 4
    max_action = 2.0

    # --- bf16 weights (default: MXU fast path), f32 accumulate/epilogue ---
    # B=8: single-tile path; B=256: 2-step grid (v7x megacore); B=600: padded 3-step grid.
    params_bf16 = init_params(k_p, state_dim, hidden, action_dim)
    for B in (8, 256, 600):
        x = jax.random.normal(k_x, (B, state_dim), jnp.float32)
        out = jax.block_until_ready(actor_forward(x, params_bf16, max_action))
        ref = actor_ref(x, params_bf16, max_action)
        assert out.shape == (B, action_dim)
        assert out.dtype == jnp.float32
        assert jnp.allclose(out, ref, atol=5e-2, rtol=5e-2), f"bf16 mismatch at B={B}"

    # --- f32 weights (reference-exact path) ---
    params_f32 = init_params(k_p, state_dim, hidden, action_dim, jnp.float32)
    x = jax.random.normal(k_x, (256, state_dim), jnp.float32)
    out = jax.block_until_ready(actor_forward(x, params_f32, max_action))
    ref = actor_ref(x, params_f32, max_action)
    assert out.shape == (256, action_dim)
    assert jnp.allclose(out, ref, atol=1e-5, rtol=1e-5), "f32 mismatch"

    print("KERNEL_OK")
</pallas_src>

<mosaic_0001>
module attributes {stable_mosaic.version = 11 : i64} {
  func.func @actor_kernel(%arg0: i32, %arg1: memref<8x16xf32, #tpu.memory_space<vmem>>, %arg2: memref<16x256xbf16, #tpu.memory_space<vmem>>, %arg3: memref<1x256xf32, #tpu.memory_space<vmem>>, %arg4: memref<256x256xbf16, #tpu.memory_space<vmem>>, %arg5: memref<1x256xf32, #tpu.memory_space<vmem>>, %arg6: memref<256x128xbf16, #tpu.memory_space<vmem>>, %arg7: memref<1x128xf32, #tpu.memory_space<vmem>>, %arg8: memref<8x128xbf16, #tpu.memory_space<vmem>>) attributes {dimension_semantics = [#tpu.dimension_semantics<parallel>], iteration_bounds = array<i64: 1>, scalar_prefetch = 0 : i64, scratch_operands = 0 : i64, tpu.core_type = #tpu.core_type<tc>, window_params = [{transform_indices = @transform_0, window_bounds = array<i64: 8, 16>}, {pipeline_mode = #tpu.pipeline_mode<synchronous>, transform_indices = @transform_1, window_bounds = array<i64: 16, 256>}, {pipeline_mode = #tpu.pipeline_mode<synchronous>, transform_indices = @transform_2, window_bounds = array<i64: 1, 256>}, {pipeline_mode = #tpu.pipeline_mode<synchronous>, transform_indices = @transform_3, window_bounds = array<i64: 256, 256>}, {pipeline_mode = #tpu.pipeline_mode<synchronous>, transform_indices = @transform_4, window_bounds = array<i64: 1, 256>}, {pipeline_mode = #tpu.pipeline_mode<synchronous>, transform_indices = @transform_5, window_bounds = array<i64: 256, 128>}, {pipeline_mode = #tpu.pipeline_mode<synchronous>, transform_indices = @transform_6, window_bounds = array<i64: 1, 128>}, {transform_indices = @transform_7, window_bounds = array<i64: 8, 128>}]} {
    %c0 = arith.constant 0 : index
    %c0_0 = arith.constant 0 : index
    %0 = vector.load %arg1[%c0, %c0_0] : memref<8x16xf32, #tpu.memory_space<vmem>>, vector<8x16xf32>
    %1 = arith.truncf %0 : vector<8x16xf32> to vector<8x16xbf16>
    %c0_1 = arith.constant 0 : index
    %c0_2 = arith.constant 0 : index
    %2 = vector.load %arg2[%c0_1, %c0_2] : memref<16x256xbf16, #tpu.memory_space<vmem>>, vector<16x256xbf16>
    %cst = arith.constant dense<0.000000e+00> : vector<8x256xf32>
    %3 = tpu.matmul %1, %2, %cst {dimension_numbers = #tpu.dot_dimension_numbers<[1], [0], [0], [1], [0, 0, 1, 1], [], []>} : vector<8x16xbf16>, vector<16x256xbf16>, vector<8x256xf32> -> vector<8x256xf32>
    %c0_3 = arith.constant 0 : index
    %c0_4 = arith.constant 0 : index
    %4 = vector.load %arg3[%c0_3, %c0_4] : memref<1x256xf32, #tpu.memory_space<vmem>>, vector<1x256xf32>
    %5 = vector.broadcast %4 : vector<1x256xf32> to vector<8x256xf32>
    %6 = arith.addf %3, %5 : vector<8x256xf32>
    %cst_5 = arith.constant 0.000000e+00 : f32
    %7 = vector.broadcast %cst_5 : f32 to vector<8x256xf32>
    %8 = arith.maximumf %6, %7 : vector<8x256xf32>
    %9 = arith.truncf %8 : vector<8x256xf32> to vector<8x256xbf16>
    %c0_6 = arith.constant 0 : index
    %c0_7 = arith.constant 0 : index
    %10 = vector.load %arg4[%c0_6, %c0_7] : memref<256x256xbf16, #tpu.memory_space<vmem>>, vector<256x256xbf16>
    %cst_8 = arith.constant dense<0.000000e+00> : vector<8x256xf32>
    %11 = tpu.matmul %9, %10, %cst_8 {dimension_numbers = #tpu.dot_dimension_numbers<[1], [0], [0], [1], [0, 0, 1, 1], [], []>} : vector<8x256xbf16>, vector<256x256xbf16>, vector<8x256xf32> -> vector<8x256xf32>
    %c0_9 = arith.constant 0 : index
    %c0_10 = arith.constant 0 : index
    %12 = vector.load %arg5[%c0_9, %c0_10] : memref<1x256xf32, #tpu.memory_space<vmem>>, vector<1x256xf32>
    %13 = vector.broadcast %12 : vector<1x256xf32> to vector<8x256xf32>
    %14 = arith.addf %11, %13 : vector<8x256xf32>
    %cst_11 = arith.constant 0.000000e+00 : f32
    %15 = vector.broadcast %cst_11 : f32 to vector<8x256xf32>
    %16 = arith.maximumf %14, %15 : vector<8x256xf32>
    %17 = arith.truncf %16 : vector<8x256xf32> to vector<8x256xbf16>
    %c0_12 = arith.constant 0 : index
    %c0_13 = arith.constant 0 : index
    %18 = vector.load %arg6[%c0_12, %c0_13] : memref<256x128xbf16, #tpu.memory_space<vmem>>, vector<256x128xbf16>
    %cst_14 = arith.constant dense<0.000000e+00> : vector<8x128xf32>
    %19 = tpu.matmul %17, %18, %cst_14 {dimension_numbers = #tpu.dot_dimension_numbers<[1], [0], [0], [1], [0, 0, 1, 1], [], []>} : vector<8x256xbf16>, vector<256x128xbf16>, vector<8x128xf32> -> vector<8x128xf32>
    %c0_15 = arith.constant 0 : index
    %c0_16 = arith.constant 0 : index
    %20 = vector.load %arg7[%c0_15, %c0_16] : memref<1x128xf32, #tpu.memory_space<vmem>>, vector<1x128xf32>
    %21 = vector.broadcast %20 : vector<1x128xf32> to vector<8x128xf32>
    %22 = arith.addf %19, %21 : vector<8x128xf32>
    %23 = math.tanh %22 : vector<8x128xf32>
    %cst_17 = arith.constant 2.000000e+00 : f32
    %24 = vector.broadcast %cst_17 : f32 to vector<8x128xf32>
    %25 = arith.mulf %24, %23 : vector<8x128xf32>
    %26 = arith.truncf %25 : vector<8x128xf32> to vector<8x128xbf16>
    %c0_18 = arith.constant 0 : index
    %c0_19 = arith.constant 0 : index
    %27 = vector.load %arg8[%c0_18, %c0_19] : memref<8x128xbf16, #tpu.memory_space<vmem>>, vector<8x128xbf16>
    tpu.vector_store %arg8[%c0_18, %c0_19], %26 {strides = array<i32>} : memref<8x128xbf16, #tpu.memory_space<vmem>>, vector<8x128xbf16>,
    return
  }
  func.func @transform_0(%arg0: i32) -> (i32, i32) {
    %c0_i32 = arith.constant 0 : i32
    %c0_i32_0 = arith.constant 0 : i32
    return %arg0, %c0_i32 : i32, i32
  }
  func.func @transform_1(%arg0: i32) -> (i32, i32) {
    %c0_i32 = arith.constant 0 : i32
    %c0_i32_0 = arith.constant 0 : i32
    %c0_i32_1 = arith.constant 0 : i32
    return %c0_i32, %c0_i32_0 : i32, i32
  }
  func.func @transform_2(%arg0: i32) -> (i32, i32) {
    %c0_i32 = arith.constant 0 : i32
    %c0_i32_0 = arith.constant 0 : i32
    %c0_i32_1 = arith.constant 0 : i32
    return %c0_i32, %c0_i32_0 : i32, i32
  }
  func.func @transform_3(%arg0: i32) -> (i32, i32) {
    %c0_i32 = arith.constant 0 : i32
    %c0_i32_0 = arith.constant 0 : i32
    %c0_i32_1 = arith.constant 0 : i32
    return %c0_i32, %c0_i32_0 : i32, i32
  }
  func.func @transform_4(%arg0: i32) -> (i32, i32) {
    %c0_i32 = arith.constant 0 : i32
    %c0_i32_0 = arith.constant 0 : i32
    %c0_i32_1 = arith.constant 0 : i32
    return %c0_i32, %c0_i32_0 : i32, i32
  }
  func.func @transform_5(%arg0: i32) -> (i32, i32) {
    %c0_i32 = arith.constant 0 : i32
    %c0_i32_0 = arith.constant 0 : i32
    %c0_i32_1 = arith.constant 0 : i32
    return %c0_i32, %c0_i32_0 : i32, i32
  }
  func.func @transform_6(%arg0: i32) -> (i32, i32) {
    %c0_i32 = arith.constant 0 : i32
    %c0_i32_0 = arith.constant 0 : i32
    %c0_i32_1 = arith.constant 0 : i32
    return %c0_i32, %c0_i32_0 : i32, i32
  }
  func.func @transform_7(%arg0: i32) -> (i32, i32) {
    %c0_i32 = arith.constant 0 : i32
    %c0_i32_0 = arith.constant 0 : i32
    return %arg0, %c0_i32 : i32, i32
  }
}

</mosaic_0001>

<llo_original>
// kernel: tpu_custom_call.1
$region0: #{tpu_custom_call.1}
  #allocation0 [shape = 'u32[]', space=smem, size = 0x4, offset = 0x4, fixed_abs, tag = 'smem constant byte address 0x4 - core index']
  #allocation1 [shape = 'u32[144,128]{1,0:T(1,128)}', space=vmem, size = 0x12000, scoped, tag = 'internal scratch']
  %s0 = inlined_call_operand.hbm [shape: f32[8,16], index: 0, kind: input, shape index: {}]
  %s1 = inlined_call_operand.hbm [shape: bf16[16,256], index: 1, kind: input, shape index: {}]
  %s2 = inlined_call_operand.vmem [shape: f32[1,256], index: 2, kind: input, shape index: {}]
  %s3 = inlined_call_operand.hbm [shape: bf16[256,256], index: 3, kind: input, shape index: {}]
  %s4 = inlined_call_operand.vmem [shape: f32[1,256], index: 4, kind: input, shape index: {}]
  %s5 = inlined_call_operand.hbm [shape: bf16[256,128], index: 5, kind: input, shape index: {}]
  %s6 = inlined_call_operand.vmem [shape: f32[1,128], index: 6, kind: input, shape index: {}]
  %s7 = inlined_call_operand.hbm [shape: bf16[8,128], index: 7, kind: output, shape index: {}]
  %s8 = sld [smem:[#allocation0]]
  $region54: #{tpu_custom_call.1} parent=0
    _
  %s10 = ssub.s32 1, %s8
  %s11 = scalar_select 0, %s10, %s8
  $region1: #{tpu_custom_call.1} parent=0
    #allocation2 [shape = 'u8[4096]{0}', space=vmem, size = 0x1000, scoped, tag = 'input window, operand 0, single buffered']
    #allocation3 [shape = 's32[1]{0}', space=sflag, size = 0x4, scoped, tag = 'scoped memory for tpu_custom_call.1']
    #allocation4 [shape = 's32[1]{0}', space=sflag, size = 0x4, scoped, tag = 'scoped memory for tpu_custom_call.1']
    #allocation5 [shape = 'u8[8192]{0}', space=vmem, size = 0x2000, scoped, tag = 'input window, operand 1, single buffered']
    #allocation6 [shape = 's32[1]{0}', space=sflag, size = 0x4, scoped, tag = 'scoped memory for tpu_custom_call.1']
    #allocation7 [shape = 'u8[131072]{0}', space=vmem, size = 0x20000, scoped, tag = 'input window, operand 3, single buffered']
    #allocation8 [shape = 'u8[65536]{0}', space=vmem, size = 0x10000, scoped, tag = 'input window, operand 5, single buffered']
    #allocation9 [shape = 's32[1]{0}', space=sflag, size = 0x4, scoped, tag = 'scoped memory for tpu_custom_call.1']
    #allocation10 [shape = 'u8[2048]{0}', space=vmem, size = 0x800, scoped, tag = 'output window, operand 0, single buffered']
    %12 = vsyncpa [#allocation3], 0
    %13 = vsyncpa [#allocation6], 0
    %14 = vsyncpa [#allocation9], 0
    %15 = vsyncpa [#allocation4], 0
    // Predicated region
    $region2: #{tpu_custom_call.1} parent=1 // pred_check
      _
    $region3: #{tpu_custom_call.1} parent=1 // pred_check_branch
      %17 = sbr.rel (0) target = $region5
    $region4: #{tpu_custom_call.1} parent=1 // pred_region
      %s19 = ssub.s32 128, 128
      %20 = vsyncadd [#allocation3], %s19
      %s22 = sshll.u32 [#allocation2], 4
      %s23 = int_to_ptr.vmem [resolvable:$true] %s22
      %25 = dma.hbm_to_vmem [thread:$0]  %s0, 128, %s23, [#allocation3]
    $region5: #{tpu_custom_call.1} parent=1 // pred_fallthru
      _
    // Predicated region
    $region6: #{tpu_custom_call.1} parent=1 // pred_check
      _
    $region7: #{tpu_custom_call.1} parent=1 // pred_check_branch
      %27 = sbr.rel (0) target = $region9
    $region8: #{tpu_custom_call.1} parent=1 // pred_region
      %s29 = ssub.s32 256, 256
      %30 = vsyncadd [#allocation6], %s29
      %s31 = sshll.u32 [#allocation5], 4
      %s32 = int_to_ptr.vmem [resolvable:$true] %s31
      %37 = dma.hbm_to_vmem [thread:$0]  %s1, 256, %s32, [#allocation6], 128, 128, 8
    $region9: #{tpu_custom_call.1} parent=1 // pred_fallthru
      _
    // Predicated region
    $region10: #{tpu_custom_call.1} parent=1 // pred_check
      _
    $region11: #{tpu_custom_call.1} parent=1 // pred_check_branch
      %39 = sbr.rel (0) target = $region13
    $region12: #{tpu_custom_call.1} parent=1 // pred_region
      _
    $region13: #{tpu_custom_call.1} parent=1 // pred_fallthru
      _
    // Predicated region
    $region14: #{tpu_custom_call.1} parent=1 // pred_check
      _
    $region15: #{tpu_custom_call.1} parent=1 // pred_check_branch
      %41 = sbr.rel (0) target = $region17
    $region16: #{tpu_custom_call.1} parent=1 // pred_region
      %s43 = ssub.s32 4096, 4096
      %44 = vsyncadd [#allocation6], %s43
      %s45 = sshll.u32 [#allocation7], 4
      %s46 = int_to_ptr.vmem [resolvable:$true] %s45
      %51 = dma.hbm_to_vmem [thread:$0]  %s3, 4096, %s46, [#allocation6], 128, 128, 8
    $region17: #{tpu_custom_call.1} parent=1 // pred_fallthru
      _
    // Predicated region
    $region18: #{tpu_custom_call.1} parent=1 // pred_check
      _
    $region19: #{tpu_custom_call.1} parent=1 // pred_check_branch
      %53 = sbr.rel (0) target = $region21
    $region20: #{tpu_custom_call.1} parent=1 // pred_region
      _
    $region21: #{tpu_custom_call.1} parent=1 // pred_fallthru
      _
    // Predicated region
    $region22: #{tpu_custom_call.1} parent=1 // pred_check
      _
    $region23: #{tpu_custom_call.1} parent=1 // pred_check_branch
      %55 = sbr.rel (0) target = $region25
    $region24: #{tpu_custom_call.1} parent=1 // pred_region
      %s57 = ssub.s32 2048, 2048
      %58 = vsyncadd [#allocation9], %s57
      %s59 = sshll.u32 [#allocation8], 4
      %s60 = int_to_ptr.vmem [resolvable:$true] %s59
      %65 = dma.hbm_to_vmem [thread:$0]  %s5, 2048, %s60, [#allocation9], 64, 64, 4
    $region25: #{tpu_custom_call.1} parent=1 // pred_fallthru
      _
    // Predicated region
    $region26: #{tpu_custom_call.1} parent=1 // pred_check
      _
    $region27: #{tpu_custom_call.1} parent=1 // pred_check_branch
      %67 = sbr.rel (0) target = $region29
    $region28: #{tpu_custom_call.1} parent=1 // pred_region
      _
    $region29: #{tpu_custom_call.1} parent=1 // pred_fallthru
      _
    // Predicated region
    $region30: #{tpu_custom_call.1} parent=1 // pred_check
      _
    $region31: #{tpu_custom_call.1} parent=1 // pred_check_branch
      %69 = sbr.rel (0) target = $region33
    $region32: #{tpu_custom_call.1} parent=1 // pred_region
      %70 = dma.done [#allocation3], 128
    $region33: #{tpu_custom_call.1} parent=1 // pred_fallthru
      _
    // Predicated region
    $region34: #{tpu_custom_call.1} parent=1 // pred_check
      _
    $region35: #{tpu_custom_call.1} parent=1 // pred_check_branch
      %72 = sbr.rel (0) target = $region37
    $region36: #{tpu_custom_call.1} parent=1 // pred_region
      %73 = dma.done [#allocation6], 256
    $region37: #{tpu_custom_call.1} parent=1 // pred_fallthru
      _
    // Predicated region
    $region38: #{tpu_custom_call.1} parent=1 // pred_check
      _
    $region39: #{tpu_custom_call.1} parent=1 // pred_check_branch
      %75 = sbr.rel (0) target = $region41
    $region40: #{tpu_custom_call.1} parent=1 // pred_region
      %76 = dma.done [#allocation6], 4096
    $region41: #{tpu_custom_call.1} parent=1 // pred_fallthru
      _
    // Predicated region
    $region42: #{tpu_custom_call.1} parent=1 // pred_check
      _
    $region43: #{tpu_custom_call.1} parent=1 // pred_check_branch
      %78 = sbr.rel (0) target = $region45
    $region44: #{tpu_custom_call.1} parent=1 // pred_region
      %79 = dma.done [#allocation9], 2048
    $region45: #{tpu_custom_call.1} parent=1 // pred_fallthru
      _
    %v81 = vld [vmem:[#allocation2] sm:$0xff]
    %v82 = vpack.c.bf16 %v81, %v81
    %v83 = vld [vmem:[#allocation5] sm:$0xff]
    %v84 = vld [vmem:[#allocation5 + $0x8] sm:$0xff]
    %v85 = vld [vmem:[%s2] sm:$0x3]
    %v87 = vlaneseq
    %v88 = vshrl.u32 %v87, 7
    %v89 = vsub.s32 0, %v88
    %v90 = vrot.slane %v85, %v89
    %v91 = vlaneseq
    %v92 = vshrl.u32 %v91, 7
    %v93 = vsub.s32 1, %v92
    %v94 = vrot.slane %v85, %v93
    %v99 = vunpack.c.l.b16 %v83
    %v100 = vunpack.c.h.b16 %v83
    %v101 = vunpack.c.l.b16 %v84
    %v102 = vunpack.c.h.b16 %v84
    %v103 = vpack.c.b16 %v101, %v99
    %v104 = vpack.c.b16 %v102, %v100
    %vm107 = vcmask 130048
    %v109 = vsel %vm107, %v82, 0
    %111 = vmatprep.subr.bf16.mxu0 %v104
    %112 = vmatpush1.bf16.msra.mxu0 %v103
    %113 = vmatprep.subr.bf16.mxu0 0
    %114 = vmatpush1.bf16.msra.mxu0 0
    %115 = vmatprep.subr.bf16.mxu0 0
    %116 = vmatpush1.bf16.msra.mxu0 0
    %117 = vmatprep.subr.bf16.mxu0 0
    %118 = vmatpush1.bf16.msra.mxu0 0
    %119 = vmatprep.subr.bf16.mxu0 0
    %120 = vmatpush1.bf16.msra.mxu0 0
    %121 = vmatprep.subr.bf16.mxu0 0
    %122 = vmatpush1.bf16.msra.mxu0 0
    %123 = vmatprep.subr.bf16.mxu0 0
    %124 = vmatpush1.bf16.msra.mxu0 0
    %125 = vmatprep.subr.bf16.mxu0 0
    %126 = vmatpush1.bf16.msra.mxu0 0
    %127 = vmatprep.subr.bf16.mxu0 0
    %128 = vmatpush1.bf16.msra.mxu0 0
    %129 = vmatprep.subr.bf16.mxu0 0
    %130 = vmatpush1.bf16.msra.mxu0 0
    %131 = vmatprep.subr.bf16.mxu0 0
    %132 = vmatpush1.bf16.msra.mxu0 0
    %133 = vmatprep.subr.bf16.mxu0 0
    %134 = vmatpush1.bf16.msra.mxu0 0
    %135 = vmatprep.subr.bf16.mxu0 0
    %136 = vmatpush1.bf16.msra.mxu0 0
    %137 = vmatprep.subr.bf16.mxu0 0
    %138 = vmatpush1.bf16.msra.mxu0 0
    %139 = vmatprep.subr.bf16.mxu0 0
    %140 = vmatpush1.bf16.msra.mxu0 0
    %141 = vmatprep.subr.bf16.mxu0 0
    %142 = vmatpush1.bf16.msra.mxu0 0
    %143 = vmatprep.mubr.bf16.mxu0 0
    %144 = vmatmul.mubr.bf16.gmra.mrb[0].mxu0 %v109
    %v145 = vpop.f32.mrb[0].mxu0
    %v146 = vadd.f32 %v90, %v145
    %v147 = vpop.f32.mrb[0].mxu0
    %v148 = vadd.f32 %v94, %v147
    %v149 = vpop.f32.mrb[0].mxu0
    %v150 = vpop.f32.mrb[0].mxu0
    %151 = vdwg.mxu0
    %v152 = vmax.f32 %v146, 0.0
    %v153 = vmax.f32 %v148, 0.0
    %v154 = vpack.c.bf16 %v152, %v152
    %v155 = vpack.c.bf16 %v153, %v153
    %v156 = vld [vmem:[#allocation7] sm:$0xff]
    %v157 = vld [vmem:[#allocation7 + $0x8] sm:$0xff]
    %v158 = vld [vmem:[#allocation7 + $0x10] sm:$0xff]
    %v159 = vld [vmem:[#allocation7 + $0x18] sm:$0xff]
    %v160 = vld [vmem:[#allocation7 + $0x20] sm:$0xff]
    %v161 = vld [vmem:[#allocation7 + $0x28] sm:$0xff]
    %v162 = vld [vmem:[#allocation7 + $0x30] sm:$0xff]
    %v163 = vld [vmem:[#allocation7 + $0x38] sm:$0xff]
    %v164 = vld [vmem:[#allocation7 + $0x40] sm:$0xff]
    %v165 = vld [vmem:[#allocation7 + $0x48] sm:$0xff]
    %v166 = vld [vmem:[#allocation7 + $0x50] sm:$0xff]
    %v167 = vld [vmem:[#allocation7 + $0x58] sm:$0xff]
    %v168 = vld [vmem:[#allocation7 + $0x60] sm:$0xff]
    %v169 = vld [vmem:[#allocation7 + $0x68] sm:$0xff]
    %v170 = vld [vmem:[#allocation7 + $0x70] sm:$0xff]
    %v171 = vld [vmem:[#allocation7 + $0x78] sm:$0xff]
    %v172 = vld [vmem:[#allocation7 + $0x80] sm:$0xff]
    %v173 = vld [vmem:[#allocation7 + $0x88] sm:$0xff]
    %v174 = vld [vmem:[#allocation7 + $0x90] sm:$0xff]
    %v175 = vld [vmem:[#allocation7 + $0x98] sm:$0xff]
    %v176 = vld [vmem:[#allocation7 + $0xa0] sm:$0xff]
    %v177 = vld [vmem:[#allocation7 + $0xa8] sm:$0xff]
    %v178 = vld [vmem:[#allocation7 + $0xb0] sm:$0xff]
    %v179 = vld [vmem:[#allocation7 + $0xb8] sm:$0xff]
    %v180 = vld [vmem:[#allocation7 + $0xc0] sm:$0xff]
    %v181 = vld [vmem:[#allocation7 + $0xc8] sm:$0xff]
    %v182 = vld [vmem:[#allocation7 + $0xd0] sm:$0xff]
    %v183 = vld [vmem:[#allocation7 + $0xd8] sm:$0xff]
    %v184 = vld [vmem:[#allocation7 + $0xe0] sm:$0xff]
    %v185 = vld [vmem:[#allocation7 + $0xe8] sm:$0xff]
    %v186 = vld [vmem:[#allocation7 + $0xf0] sm:$0xff]
    %v187 = vld [vmem:[#allocation7 + $0xf8] sm:$0xff]
    %v188 = vld [vmem:[%s4] sm:$0x3]
    %v190 = vlaneseq
    %v191 = vshrl.u32 %v190, 7
    %v192 = vsub.s32 0, %v191
    %v193 = vrot.slane %v188, %v192
    %v194 = vlaneseq
    %v195 = vshrl.u32 %v194, 7
    %v196 = vsub.s32 1, %v195
    %v197 = vrot.slane %v188, %v196
    %v232 = vunpack.c.l.b16 %v156
    %v233 = vunpack.c.h.b16 %v156
    %v234 = vunpack.c.l.b16 %v157
    %v235 = vunpack.c.h.b16 %v157
    %v236 = vunpack.c.l.b16 %v158
    %v237 = vunpack.c.h.b16 %v158
    %v238 = vunpack.c.l.b16 %v159
    %v239 = vunpack.c.h.b16 %v159
    %v240 = vunpack.c.l.b16 %v160
    %v241 = vunpack.c.h.b16 %v160
    %v242 = vunpack.c.l.b16 %v161
    %v243 = vunpack.c.h.b16 %v161
    %v244 = vunpack.c.l.b16 %v162
    %v245 = vunpack.c.h.b16 %v162
    %v246 = vunpack.c.l.b16 %v163
    %v247 = vunpack.c.h.b16 %v163
    %v248 = vunpack.c.l.b16 %v164
    %v249 = vunpack.c.h.b16 %v164
    %v250 = vunpack.c.l.b16 %v165
    %v251 = vunpack.c.h.b16 %v165
    %v252 = vunpack.c.l.b16 %v166
    %v253 = vunpack.c.h.b16 %v166
    %v254 = vunpack.c.l.b16 %v167
    %v255 = vunpack.c.h.b16 %v167
    %v256 = vunpack.c.l.b16 %v168
    %v257 = vunpack.c.h.b16 %v168
    %v258 = vunpack.c.l.b16 %v169
    %v259 = vunpack.c.h.b16 %v169
    %v260 = vunpack.c.l.b16 %v170
    %v261 = vunpack.c.h.b16 %v170
    %v262 = vunpack.c.l.b16 %v171
    %v263 = vunpack.c.h.b16 %v171
    %v264 = vunpack.c.l.b16 %v172
    %v265 = vunpack.c.h.b16 %v172
    %v266 = vunpack.c.l.b16 %v173
    %v267 = vunpack.c.h.b16 %v173
    %v268 = vunpack.c.l.b16 %v174
    %v269 = vunpack.c.h.b16 %v174
    %v270 = vunpack.c.l.b16 %v175
    %v271 = vunpack.c.h.b16 %v175
    %v272 = vunpack.c.l.b16 %v176
    %v273 = vunpack.c.h.b16 %v176
    %v274 = vunpack.c.l.b16 %v177
    %v275 = vunpack.c.h.b16 %v177
    %v276 = vunpack.c.l.b16 %v178
    %v277 = vunpack.c.h.b16 %v178
    %v278 = vunpack.c.l.b16 %v179
    %v279 = vunpack.c.h.b16 %v179
    %v280 = vunpack.c.l.b16 %v180
    %v281 = vunpack.c.h.b16 %v180
    %v282 = vunpack.c.l.b16 %v181
    %v283 = vunpack.c.h.b16 %v181
    %v284 = vunpack.c.l.b16 %v182
    %v285 = vunpack.c.h.b16 %v182
    %v286 = vunpack.c.l.b16 %v183
    %v287 = vunpack.c.h.b16 %v183
    %v288 = vunpack.c.l.b16 %v184
    %v289 = vunpack.c.h.b16 %v184
    %v290 = vunpack.c.l.b16 %v185
    %v291 = vunpack.c.h.b16 %v185
    %v292 = vunpack.c.l.b16 %v186
    %v293 = vunpack.c.h.b16 %v186
    %v294 = vunpack.c.l.b16 %v187
    %v295 = vunpack.c.h.b16 %v187
    %v296 = vpack.c.b16 %v234, %v232
    %v297 = vpack.c.b16 %v235, %v233
    %v298 = vpack.c.b16 %v238, %v236
    %v299 = vpack.c.b16 %v239, %v237
    %v300 = vpack.c.b16 %v242, %v240
    %v301 = vpack.c.b16 %v243, %v241
    %v302 = vpack.c.b16 %v246, %v244
    %v303 = vpack.c.b16 %v247, %v245
    %v304 = vpack.c.b16 %v250, %v248
    %v305 = vpack.c.b16 %v251, %v249
    %v306 = vpack.c.b16 %v254, %v252
    %v307 = vpack.c.b16 %v255, %v253
    %v308 = vpack.c.b16 %v258, %v256
    %v309 = vpack.c.b16 %v259, %v257
    %v310 = vpack.c.b16 %v262, %v260
    %v311 = vpack.c.b16 %v263, %v261
    %v312 = vpack.c.b16 %v266, %v264
    %v313 = vpack.c.b16 %v267, %v265
    %v314 = vpack.c.b16 %v270, %v268
    %v315 = vpack.c.b16 %v271, %v269
    %v316 = vpack.c.b16 %v274, %v272
    %v317 = vpack.c.b16 %v275, %v273
    %v318 = vpack.c.b16 %v278, %v276
    %v319 = vpack.c.b16 %v279, %v277
    %v320 = vpack.c.b16 %v282, %v280
    %v321 = vpack.c.b16 %v283, %v281
    %v322 = vpack.c.b16 %v286, %v284
    %v323 = vpack.c.b16 %v287, %v285
    %v324 = vpack.c.b16 %v290, %v288
    %v325 = vpack.c.b16 %v291, %v289
    %v326 = vpack.c.b16 %v294, %v292
    %v327 = vpack.c.b16 %v295, %v293
    %360 = vmatprep.subr.bf16.mxu0 %v297
    %361 = vmatpush1.bf16.msra.mxu0 %v296
    %362 = vmatprep.subr.bf16.mxu0 %v299
    %363 = vmatpush1.bf16.msra.mxu0 %v298
    %364 = vmatprep.subr.bf16.mxu0 %v301
    %365 = vmatpush1.bf16.msra.mxu0 %v300
    %366 = vmatprep.subr.bf16.mxu0 %v303
    %367 = vmatpush1.bf16.msra.mxu0 %v302
    %368 = vmatprep.subr.bf16.mxu0 %v305
    %369 = vmatpush1.bf16.msra.mxu0 %v304
    %370 = vmatprep.subr.bf16.mxu0 %v307
    %371 = vmatpush1.bf16.msra.mxu0 %v306
    %372 = vmatprep.subr.bf16.mxu0 %v309
    %373 = vmatpush1.bf16.msra.mxu0 %v308
    %374 = vmatprep.subr.bf16.mxu0 %v311
    %375 = vmatpush1.bf16.msra.mxu0 %v310
    %376 = vmatprep.subr.bf16.mxu0 %v313
    %377 = vmatpush1.bf16.msra.mxu0 %v312
    %378 = vmatprep.subr.bf16.mxu0 %v315
    %379 = vmatpush1.bf16.msra.mxu0 %v314
    %380 = vmatprep.subr.bf16.mxu0 %v317
    %381 = vmatpush1.bf16.msra.mxu0 %v316
    %382 = vmatprep.subr.bf16.mxu0 %v319
    %383 = vmatpush1.bf16.msra.mxu0 %v318
    %384 = vmatprep.subr.bf16.mxu0 %v321
    %385 = vmatpush1.bf16.msra.mxu0 %v320
    %386 = vmatprep.subr.bf16.mxu0 %v323
    %387 = vmatpush1.bf16.msra.mxu0 %v322
    %388 = vmatprep.subr.bf16.mxu0 %v325
    %389 = vmatpush1.bf16.msra.mxu0 %v324
    %390 = vmatprep.subr.bf16.mxu0 %v327
    %391 = vmatpush1.bf16.msra.mxu0 %v326
    %392 = vmatprep.mubr.bf16.mxu0 %v155
    %393 = vmatmul.mubr.bf16.gmra.mrb[0].mxu0 %v154
    %v394 = vpop.f32.mrb[0].mxu0
    %v395 = vadd.f32 %v193, %v394
    %v396 = vpop.f32.mrb[0].mxu0
    %v397 = vadd.f32 %v197, %v396
    %v398 = vpop.f32.mrb[0].mxu0
    %v399 = vpop.f32.mrb[0].mxu0
    %400 = vdwg.mxu0
    %v401 = vmax.f32 %v395, 0.0
    %v402 = vmax.f32 %v397, 0.0
    %v403 = vpack.c.bf16 %v401, %v401
    %v404 = vpack.c.bf16 %v402, %v402
    %v405 = vld [vmem:[#allocation8] sm:$0xf]
    %v406 = vld [vmem:[#allocation8 + $0x4] sm:$0xf]
    %v407 = vld [vmem:[#allocation8 + $0x8] sm:$0xf]
    %v408 = vld [vmem:[#allocation8 + $0xc] sm:$0xf]
    %v409 = vld [vmem:[#allocation8 + $0x10] sm:$0xf]
    %v410 = vld [vmem:[#allocation8 + $0x14] sm:$0xf]
    %v411 = vld [vmem:[#allocation8 + $0x18] sm:$0xf]
    %v412 = vld [vmem:[#allocation8 + $0x1c] sm:$0xf]
    %v413 = vld [vmem:[#allocation8 + $0x20] sm:$0xf]
    %v414 = vld [vmem:[#allocation8 + $0x24] sm:$0xf]
    %v415 = vld [vmem:[#allocation8 + $0x28] sm:$0xf]
    %v416 = vld [vmem:[#allocation8 + $0x2c] sm:$0xf]
    %v417 = vld [vmem:[#allocation8 + $0x30] sm:$0xf]
    %v418 = vld [vmem:[#allocation8 + $0x34] sm:$0xf]
    %v419 = vld [vmem:[#allocation8 + $0x38] sm:$0xf]
    %v420 = vld [vmem:[#allocation8 + $0x3c] sm:$0xf]
    %v421 = vld [vmem:[#allocation8 + $0x40] sm:$0xf]
    %v422 = vld [vmem:[#allocation8 + $0x44] sm:$0xf]
    %v423 = vld [vmem:[#allocation8 + $0x48] sm:$0xf]
    %v424 = vld [vmem:[#allocation8 + $0x4c] sm:$0xf]
    %v425 = vld [vmem:[#allocation8 + $0x50] sm:$0xf]
    %v426 = vld [vmem:[#allocation8 + $0x54] sm:$0xf]
    %v427 = vld [vmem:[#allocation8 + $0x58] sm:$0xf]
    %v428 = vld [vmem:[#allocation8 + $0x5c] sm:$0xf]
    %v429 = vld [vmem:[#allocation8 + $0x60] sm:$0xf]
    %v430 = vld [vmem:[#allocation8 + $0x64] sm:$0xf]
    %v431 = vld [vmem:[#allocation8 + $0x68] sm:$0xf]
    %v432 = vld [vmem:[#allocation8 + $0x6c] sm:$0xf]
    %v433 = vld [vmem:[#allocation8 + $0x70] sm:$0xf]
    %v434 = vld [vmem:[#allocation8 + $0x74] sm:$0xf]
    %v435 = vld [vmem:[#allocation8 + $0x78] sm:$0xf]
    %v436 = vld [vmem:[#allocation8 + $0x7c] sm:$0xf]
    %v437 = vld [vmem:[%s6] sm:$0x1]
    %v439 = vlaneseq
    %v440 = vshrl.u32 %v439, 7
    %v441 = vsub.s32 0, %v440
    %v442 = vrot.slane %v437, %v441
    %v476 = vunpack.c.l.b16 %v405
    %v477 = vunpack.c.l.b16 %v406
    %v478 = vunpack.c.l.b16 %v407
    %v479 = vunpack.c.l.b16 %v408
    %v480 = vunpack.c.l.b16 %v409
    %v481 = vunpack.c.l.b16 %v410
    %v482 = vunpack.c.l.b16 %v411
    %v483 = vunpack.c.l.b16 %v412
    %v484 = vunpack.c.l.b16 %v413
    %v485 = vunpack.c.l.b16 %v414
    %v486 = vunpack.c.l.b16 %v415
    %v487 = vunpack.c.l.b16 %v416
    %v488 = vunpack.c.l.b16 %v417
    %v489 = vunpack.c.l.b16 %v418
    %v490 = vunpack.c.l.b16 %v419
    %v491 = vunpack.c.l.b16 %v420
    %v492 = vunpack.c.l.b16 %v421
    %v493 = vunpack.c.l.b16 %v422
    %v494 = vunpack.c.l.b16 %v423
    %v495 = vunpack.c.l.b16 %v424
    %v496 = vunpack.c.l.b16 %v425
    %v497 = vunpack.c.l.b16 %v426
    %v498 = vunpack.c.l.b16 %v427
    %v499 = vunpack.c.l.b16 %v428
    %v500 = vunpack.c.l.b16 %v429
    %v501 = vunpack.c.l.b16 %v430
    %v502 = vunpack.c.l.b16 %v431
    %v503 = vunpack.c.l.b16 %v432
    %v504 = vunpack.c.l.b16 %v433
    %v505 = vunpack.c.l.b16 %v434
    %v506 = vunpack.c.l.b16 %v435
    %v507 = vunpack.c.l.b16 %v436
    %v508 = vpack.c.b16 %v477, %v476
    %v509 = vpack.c.b16 %v479, %v478
    %v510 = vpack.c.b16 %v481, %v480
    %v511 = vpack.c.b16 %v483, %v482
    %v512 = vpack.c.b16 %v485, %v484
    %v513 = vpack.c.b16 %v487, %v486
    %v514 = vpack.c.b16 %v489, %v488
    %v515 = vpack.c.b16 %v491, %v490
    %v516 = vpack.c.b16 %v493, %v492
    %v517 = vpack.c.b16 %v495, %v494
    %v518 = vpack.c.b16 %v497, %v496
    %v519 = vpack.c.b16 %v499, %v498
    %v520 = vpack.c.b16 %v501, %v500
    %v521 = vpack.c.b16 %v503, %v502
    %v522 = vpack.c.b16 %v505, %v504
    %v523 = vpack.c.b16 %v507, %v506
    %540 = vmatprep.subr.bf16.mxu0 0
    %541 = vmatpush1.bf16.msra.mxu0 %v508
    %542 = vmatprep.subr.bf16.mxu0 0
    %543 = vmatpush1.bf16.msra.mxu0 %v509
    %544 = vmatprep.subr.bf16.mxu0 0
    %545 = vmatpush1.bf16.msra.mxu0 %v510
    %546 = vmatprep.subr.bf16.mxu0 0
    %547 = vmatpush1.bf16.msra.mxu0 %v511
    %548 = vmatprep.subr.bf16.mxu0 0
    %549 = vmatpush1.bf16.msra.mxu0 %v512
    %550 = vmatprep.subr.bf16.mxu0 0
    %551 = vmatpush1.bf16.msra.mxu0 %v513
    %552 = vmatprep.subr.bf16.mxu0 0
    %553 = vmatpush1.bf16.msra.mxu0 %v514
    %554 = vmatprep.subr.bf16.mxu0 0
    %555 = vmatpush1.bf16.msra.mxu0 %v515
    %556 = vmatprep.subr.bf16.mxu0 0
    %557 = vmatpush1.bf16.msra.mxu0 %v516
    %558 = vmatprep.subr.bf16.mxu0 0
    %559 = vmatpush1.bf16.msra.mxu0 %v517
    %560 = vmatprep.subr.bf16.mxu0 0
    %561 = vmatpush1.bf16.msra.mxu0 %v518
    %562 = vmatprep.subr.bf16.mxu0 0
    %563 = vmatpush1.bf16.msra.mxu0 %v519
    %564 = vmatprep.subr.bf16.mxu0 0
    %565 = vmatpush1.bf16.msra.mxu0 %v520
    %566 = vmatprep.subr.bf16.mxu0 0
    %567 = vmatpush1.bf16.msra.mxu0 %v521
    %568 = vmatprep.subr.bf16.mxu0 0
    %569 = vmatpush1.bf16.msra.mxu0 %v522
    %570 = vmatprep.subr.bf16.mxu0 0
    %571 = vmatpush1.bf16.msra.mxu0 %v523
    %572 = vmatprep.mubr.bf16.mxu0 %v404
    %573 = vmatmul.mubr.bf16.gmra.mrb[0].mxu0 %v403
    %v574 = vpop.f32.mrb[0].mxu0
    %v575 = vadd.f32 %v442, %v574
    %v576 = vpop.f32.mrb[0].mxu0
    %v577 = vpop.f32.mrb[0].mxu0
    %v578 = vpop.f32.mrb[0].mxu0
    %579 = vdwg.mxu0
    %v580 = vtanh.pop %v575
    %v581 = vmul.f32 %v580, 2.0
    %v582 = vpack.c.bf16 %v581, %v581
    %583 = vst [vmem:[#allocation10] sm:$0xf] %v582
    // Predicated region
    $region46: #{tpu_custom_call.1} parent=1 // pred_check
      _
    $region47: #{tpu_custom_call.1} parent=1 // pred_check_branch
      %585 = sbr.rel (0) target = $region49
    $region48: #{tpu_custom_call.1} parent=1 // pred_region
      %s587 = ssub.s32 64, 64
      %588 = vsyncadd [#allocation4], %s587
      %s590 = sshll.u32 [#allocation10], 4
      %s591 = int_to_ptr.vmem [resolvable:$true] %s590
      %593 = dma.vmem_to_hbm [thread:$0]  %s591, 64, %s7, [#allocation4]
    $region49: #{tpu_custom_call.1} parent=1 // pred_fallthru
      _
    // Predicated region
    $region50: #{tpu_custom_call.1} parent=1 // pred_check
      _
    $region51: #{tpu_custom_call.1} parent=1 // pred_check_branch
      %595 = sbr.rel (0) target = $region53
    $region52: #{tpu_custom_call.1} parent=1 // pred_region
      %596 = dma.done [#allocation4], 64
    $region53: #{tpu_custom_call.1} parent=1 // pred_fallthru
      _
    %597 = vsyncpa [#allocation3], 1
    %598 = vsyncpa [#allocation6], 1
    %599 = vsyncpa [#allocation9], 1
    %600 = vsyncpa [#allocation4], 1

</llo_original>
